<compile_context>
chip_gen: v7x
topology: tpu7x:2x2x1
jax: 0.10.0
libtpu: 0.0.40
codegen_flags: <defaults>
</compile_context>

<pallas_src>
import numpy as np
import jax
import jax.numpy as jnp
from jax.experimental import pallas as pl
from jax.experimental.pallas import tpu as pltpu


def _round_down_mult(x, m):
    return (x // m) * m


def make_loss_fn(classes, smoothing, B, C, H, W, eps=1e-7, max_tile_lanes=None):
    """Builds a Pallas-backed SoftSegmentationLoss forward (cross_entropy)."""
    assert len(classes) == C
    HW = H * W
    s = float(smoothing)
    numel = float(B * C * H * W)
    cls_vals = [float(c) for c in classes]

    # ---- sublane-dense spatial view: H*W -> (S, L) with S as close to 8 as HW allows
    S = 8
    while HW % S != 0:
        S //= 2
    L = HW // S
    S_pad = 8  # VMEM always pads the sublane dim up to 8

    # ---- VMEM budget per lane column (padded sublanes, double buffering, temps):
    #   output block 2*C*S_pad*4 (worst case f32) + label 2*S_pad*4 + partials
    #   2*S_pad*4 + logo/f32-cast temps 2*C*S_pad*4 + misc (S,T) temps 4*S_pad*4
    bytes_per_lane = 4 * S_pad * (2 * C + 2 + 2 + 2 * C + 4)
    budget_bytes = 36 * 1024 * 1024          # headroom under v7x's 64 MiB VMEM
    t_cap = max(128, _round_down_mult(budget_bytes // bytes_per_lane, 128))
    if max_tile_lanes is not None:            # test hook to force small tiles
        t_cap = max(128, _round_down_mult(min(t_cap, max_tile_lanes), 128))

    if L <= t_cap:
        T = L                                 # single tile; full-dim block is legal
    else:
        T = None
        for cand in range(t_cap, 127, -128):  # largest 128-multiple divisor of L
            if L % cand == 0:
                T = cand
                break
        if T is None:
            T = t_cap                         # ragged last tile, masked in kernel
    n_tiles = -(-L // T)
    ragged = (n_tiles * T != L)

    # ---- core split so both v7x TensorCores get work even when B is small
    NC = 2 if (n_tiles % 2 == 0 and n_tiles >= 2) else 1
    tiles_per_core = n_tiles // NC

    def kernel_body(out_ref, lbl_ref, part_ref):
        c_idx = pl.program_id(0)
        t = pl.program_id(2)

        @pl.when(t == 0)
        def _():
            part_ref[...] = jnp.zeros_like(part_ref)

        o = out_ref[0].astype(jnp.float32)        # (C, S, T) probabilities
        lbl = lbl_ref[0, 0].astype(jnp.float32)   # (S, T) class-value map

        logo = jnp.log(o + eps)                   # (C, S, T)  (EUP)
        sum_logo = jnp.sum(logo, axis=0)          # (S, T)

        # Hot-channel gather with scalar class constants; logo[c] is a whole
        # (S, T) plane (leading-axis slice -> no sublane extraction / relayout).
        hot_logo = jnp.zeros((S, T), jnp.float32)
        for c in range(C):
            hot_logo = hot_logo + jnp.where(lbl == cls_vals[c], logo[c], 0.0)

        per_pix = (1.0 - s) * hot_logo + (s / C) * sum_logo    # (S, T)

        if ragged:
            gt = c_idx * tiles_per_core + t       # global tile index

            @pl.when(gt == n_tiles - 1)           # mask only on the last tile
            def _():
                lane = jax.lax.broadcasted_iota(jnp.int32, (S, T), 1) + gt * T
                part_ref[...] = part_ref[...] + jnp.where(
                    lane < L, per_pix, 0.0)[None, None, :, :]

            @pl.when(gt != n_tiles - 1)
            def _():
                part_ref[...] = part_ref[...] + per_pix[None, None, :, :]
        else:
            part_ref[...] = part_ref[...] + per_pix[None, None, :, :]

    grid_spec = pltpu.PrefetchScalarGridSpec(
        num_scalar_prefetch=0,
        grid=(NC, B, tiles_per_core),             # (core-split, batch, reduce)
        in_specs=[
            pl.BlockSpec((1, C, S, T),
                         lambda c, b, t: (b, 0, 0, c * tiles_per_core + t)),
            pl.BlockSpec((1, 1, S, T),
                         lambda c, b, t: (b, 0, 0, c * tiles_per_core + t)),
        ],
        out_specs=pl.BlockSpec((1, 1, S, T), lambda c, b, t: (c, b, 0, 0)),
    )

    cost = pl.CostEstimate(
        flops=int(6 * B * C * HW),
        transcendentals=int(B * C * HW),
        bytes_accessed=int(4 * (B * C * HW + B * HW + NC * B * S * T)),
    )

    pallas_fn = pl.pallas_call(
        kernel_body,
        out_shape=jax.ShapeDtypeStruct((NC, B, S, T), jnp.float32),
        grid_spec=grid_spec,
        compiler_params=pltpu.CompilerParams(
            dimension_semantics=("parallel", "parallel", "arbitrary"),
            vmem_limit_bytes=48 * 1024 * 1024,
        ),
        cost_estimate=cost,
    )

    def loss_fn(output, target):
        # output: [B, C, H, W] probabilities (native dtype); target: [B, 1, H, W]
        o = output.reshape(B, C, S, L)        # metadata-only reshape, no pad/cast
        lbl = target.reshape(B, 1, S, L)
        partials = pallas_fn(o, lbl)          # (NC, B, S, T) f32 partial sums
        return -jnp.sum(partials) / numel

    return loss_fn


# ---------------------------------------------------------------------------
# Pure-JAX reference (mirror of the PyTorch module) for verification
# ---------------------------------------------------------------------------
def reference_loss(output, target, classes, smoothing, eps=1e-7):
    C = output.shape[1]
    cls = jnp.asarray(classes, jnp.float32).reshape(1, -1, 1, 1)
    hot = (target == cls).astype(jnp.float32)
    soft = (1.0 - smoothing) * hot + smoothing / C
    return -jnp.sum(soft * jnp.log(output.astype(jnp.float32) + eps)) / output.size


# ---------------------------------------------------------------------------
if __name__ == "__main__":
    smoothing = 0.1
    eps = 1e-7

    def run_case(B, C, H, W, classes, max_tile_lanes=None, seed=0):
        key = jax.random.PRNGKey(seed)
        k1, k2 = jax.random.split(key)
        logits = jax.random.normal(k1, (B, C, H, W), dtype=jnp.float32)
        output = jax.nn.softmax(logits, axis=1)          # per-pixel class probs
        idx = jax.random.randint(k2, (B, 1, H, W), 0, C)
        target = jnp.asarray(classes, jnp.float32)[idx]  # class-value label map

        loss_fn = make_loss_fn(classes, smoothing, B, C, H, W, eps=eps,
                               max_tile_lanes=max_tile_lanes)
        loss = jax.block_until_ready(loss_fn(output, target))
        ref = jax.block_until_ready(
            reference_loss(output, target, classes, smoothing, eps=eps))
        np.testing.assert_allclose(np.asarray(loss), np.asarray(ref),
                                   rtol=1e-5, atol=1e-6)

    # Small shapes from the module spec (single-tile path).
    run_case(B=2, C=4, H=16, W=16, classes=[10, 20, 30, 40], seed=0)
    # Multi-tile + v7x core-split path (forced small lane tile).
    run_case(B=1, C=4, H=16, W=128, classes=[10, 20, 30, 40],
             max_tile_lanes=128, seed=1)
    # Ragged last-tile masking path (L not a multiple of the tile).
    run_case(B=1, C=4, H=20, W=128, classes=[10, 20, 30, 40],
             max_tile_lanes=128, seed=2)

    print("KERNEL_OK")
</pallas_src>

<mosaic_0001>
module attributes {stable_mosaic.version = 11 : i64} {
  func.func @kernel_body(%arg0: i32, %arg1: i32, %arg2: i32, %arg3: memref<1x4x8x32xf32, #tpu.memory_space<vmem>>, %arg4: memref<1x1x8x32xf32, #tpu.memory_space<vmem>>, %arg5: memref<1x1x8x32xf32, #tpu.memory_space<vmem>>) attributes {dimension_semantics = [#tpu.dimension_semantics<parallel>, #tpu.dimension_semantics<parallel>, #tpu.dimension_semantics<arbitrary>], iteration_bounds = array<i64: 1, 2, 1>, scalar_prefetch = 0 : i64, scratch_operands = 0 : i64, tpu.core_type = #tpu.core_type<tc>, window_params = [{transform_indices = @transform_0, window_bounds = array<i64: 1, 4, 8, 32>}, {transform_indices = @transform_1, window_bounds = array<i64: 1, 1, 8, 32>}, {transform_indices = @transform_2, window_bounds = array<i64: 1, 1, 8, 32>}]} {
    %c0_i32 = arith.constant 0 : i32
    %0 = arith.cmpi eq, %arg2, %c0_i32 : i32
    %1 = arith.extui %0 : i1 to i32
    %c0_i32_0 = arith.constant 0 : i32
    %2 = arith.cmpi ne, %1, %c0_i32_0 : i32
    scf.if %2 {
      %cst_28 = arith.constant 0.000000e+00 : f32
      %49 = vector.broadcast %cst_28 : f32 to vector<1x1x8x32xf32>
      %c0_29 = arith.constant 0 : index
      %c0_30 = arith.constant 0 : index
      %c0_31 = arith.constant 0 : index
      %c0_32 = arith.constant 0 : index
      %50 = vector.load %arg5[%c0_29, %c0_30, %c0_31, %c0_32] : memref<1x1x8x32xf32, #tpu.memory_space<vmem>>, vector<1x1x8x32xf32>
      tpu.vector_store %arg5[%c0_29, %c0_30, %c0_31, %c0_32], %49 {strides = array<i32>} : memref<1x1x8x32xf32, #tpu.memory_space<vmem>>, vector<1x1x8x32xf32>,
    } else {
    }
    %c0 = arith.constant 0 : index
    %c0_1 = arith.constant 0 : index
    %c0_2 = arith.constant 0 : index
    %c0_3 = arith.constant 0 : index
    %3 = vector.load %arg3[%c0, %c0_1, %c0_2, %c0_3] : memref<1x4x8x32xf32, #tpu.memory_space<vmem>>, vector<1x4x8x32xf32>
    %4 = vector.shape_cast %3 : vector<1x4x8x32xf32> to vector<4x8x32xf32>
    %c0_4 = arith.constant 0 : index
    %c0_5 = arith.constant 0 : index
    %c0_6 = arith.constant 0 : index
    %c0_7 = arith.constant 0 : index
    %5 = vector.load %arg4[%c0_4, %c0_5, %c0_6, %c0_7] : memref<1x1x8x32xf32, #tpu.memory_space<vmem>>, vector<1x1x8x32xf32>
    %6 = vector.shape_cast %5 : vector<1x1x8x32xf32> to vector<8x32xf32>
    %cst = arith.constant 1.000000e-07 : f32
    %7 = vector.broadcast %cst : f32 to vector<4x8x32xf32>
    %8 = arith.addf %4, %7 : vector<4x8x32xf32>
    %9 = math.log %8 : vector<4x8x32xf32>
    %cst_8 = arith.constant dense<0.000000e+00> : vector<8x32xf32>
    %10 = vector.multi_reduction <add>, %9, %cst_8 [0] : vector<4x8x32xf32> to vector<8x32xf32>
    %cst_9 = arith.constant 0.000000e+00 : f32
    %11 = vector.broadcast %cst_9 : f32 to vector<8x32xf32>
    %cst_10 = arith.constant 1.000000e+01 : f32
    %12 = vector.broadcast %cst_10 : f32 to vector<8x32xf32>
    %13 = arith.cmpf oeq, %6, %12 : vector<8x32xf32>
    %14 = vector.extract_strided_slice %9 {offsets = [0, 0, 0], sizes = [1, 8, 32], strides = [1, 1, 1]} : vector<4x8x32xf32> to vector<1x8x32xf32>
    %15 = vector.shape_cast %14 : vector<1x8x32xf32> to vector<8x32xf32>
    %cst_11 = arith.constant 0.000000e+00 : f32
    %16 = vector.broadcast %cst_11 : f32 to vector<8x32xf32>
    %17 = arith.select %13, %15, %16 : vector<8x32xi1>, vector<8x32xf32>
    %18 = arith.addf %11, %17 : vector<8x32xf32>
    %cst_12 = arith.constant 2.000000e+01 : f32
    %19 = vector.broadcast %cst_12 : f32 to vector<8x32xf32>
    %20 = arith.cmpf oeq, %6, %19 : vector<8x32xf32>
    %21 = vector.extract_strided_slice %9 {offsets = [1, 0, 0], sizes = [1, 8, 32], strides = [1, 1, 1]} : vector<4x8x32xf32> to vector<1x8x32xf32>
    %22 = vector.shape_cast %21 : vector<1x8x32xf32> to vector<8x32xf32>
    %cst_13 = arith.constant 0.000000e+00 : f32
    %23 = vector.broadcast %cst_13 : f32 to vector<8x32xf32>
    %24 = arith.select %20, %22, %23 : vector<8x32xi1>, vector<8x32xf32>
    %25 = arith.addf %18, %24 : vector<8x32xf32>
    %cst_14 = arith.constant 3.000000e+01 : f32
    %26 = vector.broadcast %cst_14 : f32 to vector<8x32xf32>
    %27 = arith.cmpf oeq, %6, %26 : vector<8x32xf32>
    %28 = vector.extract_strided_slice %9 {offsets = [2, 0, 0], sizes = [1, 8, 32], strides = [1, 1, 1]} : vector<4x8x32xf32> to vector<1x8x32xf32>
    %29 = vector.shape_cast %28 : vector<1x8x32xf32> to vector<8x32xf32>
    %cst_15 = arith.constant 0.000000e+00 : f32
    %30 = vector.broadcast %cst_15 : f32 to vector<8x32xf32>
    %31 = arith.select %27, %29, %30 : vector<8x32xi1>, vector<8x32xf32>
    %32 = arith.addf %25, %31 : vector<8x32xf32>
    %cst_16 = arith.constant 4.000000e+01 : f32
    %33 = vector.broadcast %cst_16 : f32 to vector<8x32xf32>
    %34 = arith.cmpf oeq, %6, %33 : vector<8x32xf32>
    %35 = vector.extract_strided_slice %9 {offsets = [3, 0, 0], sizes = [1, 8, 32], strides = [1, 1, 1]} : vector<4x8x32xf32> to vector<1x8x32xf32>
    %36 = vector.shape_cast %35 : vector<1x8x32xf32> to vector<8x32xf32>
    %cst_17 = arith.constant 0.000000e+00 : f32
    %37 = vector.broadcast %cst_17 : f32 to vector<8x32xf32>
    %38 = arith.select %34, %36, %37 : vector<8x32xi1>, vector<8x32xf32>
    %39 = arith.addf %32, %38 : vector<8x32xf32>
    %cst_18 = arith.constant 0.899999976 : f32
    %40 = vector.broadcast %cst_18 : f32 to vector<8x32xf32>
    %41 = arith.mulf %40, %39 : vector<8x32xf32>
    %cst_19 = arith.constant 2.500000e-02 : f32
    %42 = vector.broadcast %cst_19 : f32 to vector<8x32xf32>
    %43 = arith.mulf %42, %10 : vector<8x32xf32>
    %44 = arith.addf %41, %43 : vector<8x32xf32>
    %c0_20 = arith.constant 0 : index
    %c0_21 = arith.constant 0 : index
    %c0_22 = arith.constant 0 : index
    %c0_23 = arith.constant 0 : index
    %45 = vector.load %arg5[%c0_20, %c0_21, %c0_22, %c0_23] : memref<1x1x8x32xf32, #tpu.memory_space<vmem>>, vector<1x1x8x32xf32>
    %46 = vector.shape_cast %44 : vector<8x32xf32> to vector<1x1x8x32xf32>
    %47 = arith.addf %45, %46 : vector<1x1x8x32xf32>
    %c0_24 = arith.constant 0 : index
    %c0_25 = arith.constant 0 : index
    %c0_26 = arith.constant 0 : index
    %c0_27 = arith.constant 0 : index
    %48 = vector.load %arg5[%c0_24, %c0_25, %c0_26, %c0_27] : memref<1x1x8x32xf32, #tpu.memory_space<vmem>>, vector<1x1x8x32xf32>
    tpu.vector_store %arg5[%c0_24, %c0_25, %c0_26, %c0_27], %47 {strides = array<i32>} : memref<1x1x8x32xf32, #tpu.memory_space<vmem>>, vector<1x1x8x32xf32>,
    return
  }
  func.func @transform_0(%arg0: i32, %arg1: i32, %arg2: i32) -> (i32, i32, i32, i32) {
    %c1_i32 = arith.constant 1 : i32
    %0 = arith.muli %arg0, %c1_i32 : i32
    %1 = arith.addi %0, %arg2 : i32
    %c0_i32 = arith.constant 0 : i32
    %c0_i32_0 = arith.constant 0 : i32
    %c0_i32_1 = arith.constant 0 : i32
    return %arg1, %c0_i32, %c0_i32_0, %1 : i32, i32, i32, i32
  }
  func.func @transform_1(%arg0: i32, %arg1: i32, %arg2: i32) -> (i32, i32, i32, i32) {
    %c1_i32 = arith.constant 1 : i32
    %0 = arith.muli %arg0, %c1_i32 : i32
    %1 = arith.addi %0, %arg2 : i32
    %c0_i32 = arith.constant 0 : i32
    %c0_i32_0 = arith.constant 0 : i32
    %c0_i32_1 = arith.constant 0 : i32
    return %arg1, %c0_i32, %c0_i32_0, %1 : i32, i32, i32, i32
  }
  func.func @transform_2(%arg0: i32, %arg1: i32, %arg2: i32) -> (i32, i32, i32, i32) {
    %c0_i32 = arith.constant 0 : i32
    %c0_i32_0 = arith.constant 0 : i32
    %c0_i32_1 = arith.constant 0 : i32
    return %arg0, %arg1, %c0_i32, %c0_i32_0 : i32, i32, i32, i32
  }
}

</mosaic_0001>

<llo_original>
// kernel: tpu_custom_call.1
$region0: #{tpu_custom_call.1}
  #allocation0 [shape = 'u32[]', space=smem, size = 0x4, offset = 0x4, fixed_abs, tag = 'smem constant byte address 0x4 - core index']
  #allocation1 [shape = 'u32[144,128]{1,0:T(1,128)}', space=vmem, size = 0x12000, scoped, tag = 'internal scratch']
  %s0 = inlined_call_operand.hbm [shape: f32[2,4,8,32], index: 0, kind: input, shape index: {}]
  %s1 = inlined_call_operand.hbm [shape: f32[2,1,8,32], index: 1, kind: input, shape index: {}]
  %s2 = inlined_call_operand.hbm [shape: f32[1,2,8,32], index: 2, kind: output, shape index: {}]
  %s3 = sld [smem:[#allocation0]]
  $region53: #{tpu_custom_call.1} parent=0
    _
  %s5 = ssub.s32 1, %s3
  %s6 = scalar_select 0, %s5, %s3
  $region1: #{tpu_custom_call.1} parent=0
    #allocation2 [shape = 'u8[32768]{0}', space=vmem, size = 0x8000, scoped, tag = 'input window, operand 0']
    #allocation3 [shape = 's32[2]{0}', space=sflag, size = 0x8, scoped, tag = 'scoped memory for tpu_custom_call.1']
    #allocation4 [shape = 's32[2]{0}', space=sflag, size = 0x8, scoped, tag = 'scoped memory for tpu_custom_call.1']
    #allocation5 [shape = 'u8[8192]{0}', space=vmem, size = 0x2000, scoped, tag = 'input window, operand 1']
    #allocation6 [shape = 's32[2]{0}', space=sflag, size = 0x8, scoped, tag = 'scoped memory for tpu_custom_call.1']
    #allocation7 [shape = 'u8[8192]{0}', space=vmem, size = 0x2000, scoped, tag = 'output window, operand 0']
    %7 = vsyncpa [#allocation3], 0
    %s8 = scalar_lea.sflag [#allocation3], 1
    %9 = vsyncpa %s8, 0
    %10 = vsyncpa [#allocation6], 0
    %s11 = scalar_lea.sflag [#allocation6], 1
    %12 = vsyncpa %s11, 0
    %13 = vsyncpa [#allocation4], 0
    %s14 = scalar_lea.sflag [#allocation4], 1
    %15 = vsyncpa %s14, 0
    loop: start=0, step=1, limit=4
    $region2: #{tpu_custom_call.1} parent=1 // loop_pre_header
      _
    $region3: #{tpu_custom_call.1} parent=1 // loop_header
      %s17 = sphi 0, %s21
      %p18 = scmp.ge.s32.totalorder %s17, 4
      %s24 = sphi 0, %s43
      %s25 = sphi 0, %s39
      %s26 = sphi 0, %s35
      %s27 = sphi 0, %s24
      %s28 = sphi 0, %s25
      %s29 = sphi 0, %s26
      %s30 = sphi 0, %s27
      %s31 = sphi 0, %s28
      %s32 = sphi 0, %s29
      %s50 = sphi 0, %s52
      %s53 = sphi 0, %s50
      %s54 = sphi 0, %s53
      %s70 = sphi 0, %s54
      %s80 = sphi 0, %s82
      %s83 = sphi 0, %s80
      %s84 = sphi 0, %s83
      %s100 = sphi 0, %s84
      %s108 = sphi 0, %s110
      %s111 = sphi 0, %s108
      %s112 = sphi 0, %s111
      %s128 = sphi 0, %s112
    $region4: #{tpu_custom_call.1} parent=1 // loop_header_branch
      %20 = sbr.rel (%p18) target = $region8
    $region5: #{tpu_custom_call.1} parent=1 // loop_body
      %s22 = ssub.s32 %s17, 1
      %s23 = ssub.s32 %s17, 2
      %s33 = sadd.s32 1, %s26
      %p34 = scmp.ge.s32.totalorder %s33, 1
      %s35 = scalar_select %p34, 0, %s33
      %s36 = sadd.s32 1, %s25
      %s37 = scalar_select %p34, %s36, %s25
      %p38 = scmp.ge.s32.totalorder %s37, 2
      %s39 = scalar_select %p38, 0, %s37
      %s40 = sadd.s32 1, %s24
      %s41 = scalar_select %p38, %s40, %s24
      %p42 = scmp.ge.s32.totalorder %s41, 1
      %s43 = scalar_select %p42, 0, %s41
      %s44 = sadd.s32 %s24, %s26
      %s45 = sadd.s32 %s43, %s35
      %s46 = ssub.s32 %s25, %s39
      %s47 = ssub.s32 %s44, %s45
      %s48 = sor.u32 %s46, %s47
      %p49 = scmp.eq.s32.totalorder %s48, 0
      %s51 = sadd.s32 %s50, 1
      %s52 = scalar_select %p49, %s50, %s51
      %p55 = pneg %p49
      %p56 = scmp.eq.s32.totalorder %s17, 1
      %p57 = por %p55, %p56
      %p58 = scmp.ne.s32.totalorder %s50, %s53
      %p59 = scmp.eq.s32.totalorder %s17, 0
      %p60 = por %p58, %p59
      %p61 = scmp.ne.s32.totalorder %s50, %s53
      %p62 = scmp.eq.s32.totalorder %s22, 1
      %p63 = por %p61, %p62
      %p64 = scmp.ne.s32.totalorder %s53, %s54
      %p65 = scmp.eq.s32.totalorder %s22, 0
      %p66 = por %p64, %p65
      %p67 = scmp.ne.s32.totalorder %s53, %s54
      %p68 = scmp.eq.s32.totalorder %s23, 1
      %p69 = por %p67, %p68
      %p71 = scmp.ne.s32.totalorder %s54, %s70
      %p72 = scmp.eq.s32.totalorder %s23, 0
      %p73 = por %p71, %p72
      %s74 = sadd.s32 %s24, %s26
      %s75 = sadd.s32 %s43, %s35
      %s76 = ssub.s32 %s25, %s39
      %s77 = ssub.s32 %s74, %s75
      %s78 = sor.u32 %s76, %s77
      %p79 = scmp.eq.s32.totalorder %s78, 0
      %s81 = sadd.s32 %s80, 1
      %s82 = scalar_select %p79, %s80, %s81
      %p85 = pneg %p79
      %p86 = scmp.eq.s32.totalorder %s17, 1
      %p87 = por %p85, %p86
      %p88 = scmp.ne.s32.totalorder %s80, %s83
      %p89 = scmp.eq.s32.totalorder %s17, 0
      %p90 = por %p88, %p89
      %p91 = scmp.ne.s32.totalorder %s80, %s83
      %p92 = scmp.eq.s32.totalorder %s22, 1
      %p93 = por %p91, %p92
      %p94 = scmp.ne.s32.totalorder %s83, %s84
      %p95 = scmp.eq.s32.totalorder %s22, 0
      %p96 = por %p94, %p95
      %p97 = scmp.ne.s32.totalorder %s83, %s84
      %p98 = scmp.eq.s32.totalorder %s23, 1
      %p99 = por %p97, %p98
      %p101 = scmp.ne.s32.totalorder %s84, %s100
      %p102 = scmp.eq.s32.totalorder %s23, 0
      %p103 = por %p101, %p102
      %s104 = ssub.s32 %s24, %s43
      %s105 = ssub.s32 %s25, %s39
      %s106 = sor.u32 %s104, %s105
      %p107 = scmp.eq.s32.totalorder %s106, 0
      %s109 = sadd.s32 %s108, 1
      %s110 = scalar_select %p107, %s108, %s109
      %p113 = pneg %p107
      %p114 = scmp.eq.s32.totalorder %s17, 1
      %p115 = por %p113, %p114
      %p116 = scmp.ne.s32.totalorder %s108, %s111
      %p117 = scmp.eq.s32.totalorder %s17, 0
      %p118 = por %p116, %p117
      %p119 = scmp.ne.s32.totalorder %s108, %s111
      %p120 = scmp.eq.s32.totalorder %s22, 1
      %p121 = por %p119, %p120
      %p122 = scmp.ne.s32.totalorder %s111, %s112
      %p123 = scmp.eq.s32.totalorder %s22, 0
      %p124 = por %p122, %p123
      %p125 = scmp.ne.s32.totalorder %s111, %s112
      %p126 = scmp.eq.s32.totalorder %s23, 1
      %p127 = por %p125, %p126
      %p129 = scmp.ne.s32.totalorder %s112, %s128
      %p130 = scmp.eq.s32.totalorder %s23, 0
      %p131 = por %p129, %p130
      %p132 = scmp.le.s32.totalorder 1, %s17
      %p133 = scmp.lt.s32.totalorder %s17, 3
      %p134 = pnand %p132, %p133
      %p135 = pneg %p134
      // Predicated region
      $region9: #{tpu_custom_call.1} parent=5 // pred_check
        _
      $region10: #{tpu_custom_call.1} parent=5 // pred_check_branch
        %137 = sbr.rel (%p134) target = $region12
      $region11: #{tpu_custom_call.1} parent=5 // pred_region
        %s138 = ssub.s32 %s17, 1
      $region12: #{tpu_custom_call.1} parent=5 // pred_fallthru
        _
      %p139 = scmp.lt.s32.totalorder %s17, 2
      // Predicated region
      $region13: #{tpu_custom_call.1} parent=5 // pred_check
        %p140 = pneg %p139
      $region14: #{tpu_custom_call.1} parent=5 // pred_check_branch
        %142 = sbr.rel (%p140) target = $region16
      $region15: #{tpu_custom_call.1} parent=5 // pred_region
        // Predicated region
        $region17: #{tpu_custom_call.1} parent=15 // pred_check
          %p143 = pneg %p60
        $region18: #{tpu_custom_call.1} parent=15 // pred_check_branch
          %145 = sbr.rel (%p143) target = $region20
        $region19: #{tpu_custom_call.1} parent=15 // pred_region
          %s146 = sand.u32 %s50, 1
          %s147 = scalar_lea.sflag [#allocation3], %s146
          %s148 = sand.u32 %s50, 1
          %s149 = smul.addr %s148, 32
          %s150 = scalar_lea.vmem [#allocation2], %s149
          %s151 = sadd.s32 %s24, %s26
          %s153 = ssub.s32 512, 512
          %154 = vsyncadd %s147, %s153
          %s155 = smul.addr %s25, 4
          %s156 = sadd.s32 %s151, %s155
          %s157 = smul.addr %s156, 128
          %s158 = scalar_lea.hbm %s0, %s157
          %s159 = sshll.u32 %s150, 4
          %s160 = int_to_ptr.vmem [resolvable:$true] %s159
          %165 = dma.hbm_to_vmem [thread:$0]  %s158, 512, %s160, %s147, 128, 128, 8
        $region20: #{tpu_custom_call.1} parent=15 // pred_fallthru
          _
        // Predicated region
        $region21: #{tpu_custom_call.1} parent=15 // pred_check
          %p166 = pneg %p90
        $region22: #{tpu_custom_call.1} parent=15 // pred_check_branch
          %168 = sbr.rel (%p166) target = $region24
        $region23: #{tpu_custom_call.1} parent=15 // pred_region
          %s169 = sand.u32 %s80, 1
          %s170 = scalar_lea.sflag [#allocation6], %s169
          %s171 = sand.u32 %s80, 1
          %s172 = smul.addr %s171, 8
          %s173 = scalar_lea.vmem [#allocation5], %s172
          %s174 = sadd.s32 %s24, %s26
          %s176 = ssub.s32 128, 128
          %177 = vsyncadd %s170, %s176
          %s178 = sadd.s32 %s174, %s25
          %s179 = smul.addr %s178, 128
          %s180 = scalar_lea.hbm %s1, %s179
          %s182 = sshll.u32 %s173, 4
          %s183 = int_to_ptr.vmem [resolvable:$true] %s182
          %185 = dma.hbm_to_vmem [thread:$0]  %s180, 128, %s183, %s170
        $region24: #{tpu_custom_call.1} parent=15 // pred_fallthru
          _
      $region16: #{tpu_custom_call.1} parent=5 // pred_fallthru
        _
      %p186 = scmp.le.s32.totalorder 1, %s17
      %p187 = scmp.lt.s32.totalorder %s17, 3
      %p188 = pnand %p186, %p187
      %p189 = pneg %p188
      // Predicated region
      $region25: #{tpu_custom_call.1} parent=5 // pred_check
        _
      $region26: #{tpu_custom_call.1} parent=5 // pred_check_branch
        %191 = sbr.rel (%p188) target = $region28
      $region27: #{tpu_custom_call.1} parent=5 // pred_region
        %s192 = ssub.s32 %s17, 1
        %s193 = sand.u32 %s53, 1
        %s194 = scalar_lea.sflag [#allocation3], %s193
        %s195 = sand.u32 %s53, 1
        %s196 = smul.addr %s195, 32
        %s197 = scalar_lea.vmem [#allocation2], %s196
        // Predicated region
        $region29: #{tpu_custom_call.1} parent=27 // pred_check
          %p198 = pneg %p66
        $region30: #{tpu_custom_call.1} parent=27 // pred_check_branch
          %200 = sbr.rel (%p198) target = $region32
        $region31: #{tpu_custom_call.1} parent=27 // pred_region
          %201 = dma.done %s194, 512
        $region32: #{tpu_custom_call.1} parent=27 // pred_fallthru
          _
        %s202 = sand.u32 %s83, 1
        %s203 = scalar_lea.sflag [#allocation6], %s202
        %s204 = sand.u32 %s83, 1
        %s205 = smul.addr %s204, 8
        %s206 = scalar_lea.vmem [#allocation5], %s205
        // Predicated region
        $region33: #{tpu_custom_call.1} parent=27 // pred_check
          %p207 = pneg %p96
        $region34: #{tpu_custom_call.1} parent=27 // pred_check_branch
          %209 = sbr.rel (%p207) target = $region36
        $region35: #{tpu_custom_call.1} parent=27 // pred_region
          %210 = dma.done %s203, 128
        $region36: #{tpu_custom_call.1} parent=27 // pred_fallthru
          _
        %s211 = sand.u32 %s53, 1
        %s212 = scalar_lea.sflag [#allocation3], %s211
        %s213 = sand.u32 %s53, 1
        %s214 = smul.addr %s213, 32
        %s215 = scalar_lea.vmem [#allocation2], %s214
        %p216 = pneg %p66
        %p217 = pneg %p63
        %s218 = sand.u32 %s83, 1
        %s219 = scalar_lea.sflag [#allocation6], %s218
        %s220 = sand.u32 %s83, 1
        %s221 = smul.addr %s220, 8
        %s222 = scalar_lea.vmem [#allocation5], %s221
        %p223 = pneg %p96
        %p224 = pneg %p93
        %p225 = pneg %p124
        %p226 = pneg %p121
        %s227 = sand.u32 %s111, 1
        %s228 = scalar_lea.sflag [#allocation4], %s227
        %s229 = sand.u32 %s111, 1
        %s230 = smul.addr %s229, 8
        %s231 = scalar_lea.vmem [#allocation7], %s230
        %s232 = sadd.s32 %s27, %s29
        %s233 = sadd.s32 %s27, %s29
        %p234 = scmp.eq.s32.totalorder %s29, 0
        // Predicated region
        $region37: #{tpu_custom_call.1} parent=27 // pred_check
          %p235 = pneg %p234
        $region38: #{tpu_custom_call.1} parent=27 // pred_check_branch
          %237 = sbr.rel (%p235) target = $region40
        $region39: #{tpu_custom_call.1} parent=27 // pred_region
          %vm238 = vcmask 261120
          %239 = vst.msk [vmem:[%s231] sm:$0xff] %vm238, 0.0
        $region40: #{tpu_custom_call.1} parent=27 // pred_fallthru
          _
        %v240 = vld [vmem:[%s197] sm:$0xff]
        %v241 = vld [vmem:[%s197 + $0x8] sm:$0xff]
        %v242 = vld [vmem:[%s197 + $0x10] sm:$0xff]
        %v243 = vld [vmem:[%s197 + $0x18] sm:$0xff]
        %v244 = vld [vmem:[%s206] sm:$0xff]
        %v245 = vadd.f32 %v240, 1e-07
        %v246 = vadd.f32 %v241, 1e-07
        %v247 = vadd.f32 %v242, 1e-07
        %v248 = vadd.f32 %v243, 1e-07
        %v249 = vlog2.pop %v245
        %v250 = vmul.f32 %v249, 0.6931472
        %v251 = vlog2.pop %v246
        %v252 = vmul.f32 %v251, 0.6931472
        %v253 = vlog2.pop %v247
        %v254 = vmul.f32 %v253, 0.6931472
        %v255 = vlog2.pop %v248
        %v256 = vmul.f32 %v255, 0.6931472
        %vm257 = vcmask 261120
        %v258 = vsel %vm257, %v250, 0.0
        %v259 = vsel %vm257, %v252, 0.0
        %v260 = vadd.f32 %v258, %v259
        %v261 = vsel %vm257, %v254, 0.0
        %v262 = vadd.f32 %v260, %v261
        %v263 = vsel %vm257, %v256, 0.0
        %v264 = vadd.f32 %v262, %v263
        %vm265 = vcmp.eq.f32.partialorder %v244, 10.0
        %v266 = vsel %vm265, %v250, 0.0
        %v267 = vadd.f32 %v266, 0.0
        %vm268 = vcmp.eq.f32.partialorder %v244, 20.0
        %v269 = vsel %vm268, %v252, 0.0
        %v270 = vadd.f32 %v267, %v269
        %vm271 = vcmp.eq.f32.partialorder %v244, 30.0
        %v272 = vsel %vm271, %v254, 0.0
        %v273 = vadd.f32 %v270, %v272
        %vm274 = vcmp.eq.f32.partialorder %v244, 40.0
        %v275 = vsel %vm274, %v256, 0.0
        %v276 = vadd.f32 %v273, %v275
        %v277 = vmul.f32 %v276, 0.9
        %v278 = vmul.f32 %v264, 0.025
        %v279 = vadd.f32 %v277, %v278
        %v280 = vld [vmem:[%s231] sm:$0xff]
        %v281 = vadd.f32 %v280, %v279
        %282 = vst.msk [vmem:[%s231] sm:$0xff] %vm257, %v281
        %s283 = sand.u32 %s111, 1
        %s284 = scalar_lea.sflag [#allocation4], %s283
        %s285 = sand.u32 %s111, 1
        %s286 = smul.addr %s285, 8
        %s287 = scalar_lea.vmem [#allocation7], %s286
        // Predicated region
        $region41: #{tpu_custom_call.1} parent=27 // pred_check
          %p288 = pneg %p121
        $region42: #{tpu_custom_call.1} parent=27 // pred_check_branch
          %290 = sbr.rel (%p288) target = $region44
        $region43: #{tpu_custom_call.1} parent=27 // pred_region
          %s292 = ssub.s32 128, 128
          %293 = vsyncadd %s284, %s292
          %s294 = smul.addr %s27, 2
          %s295 = sadd.s32 %s28, %s294
          %s296 = smul.addr %s295, 128
          %s297 = scalar_lea.hbm %s2, %s296
          %s299 = sshll.u32 %s287, 4
          %s300 = int_to_ptr.vmem [resolvable:$true] %s299
          %302 = dma.vmem_to_hbm [thread:$0]  %s300, 128, %s297, %s284
        $region44: #{tpu_custom_call.1} parent=27 // pred_fallthru
          _
      $region28: #{tpu_custom_call.1} parent=5 // pred_fallthru
        _
      %p303 = scmp.le.s32.totalorder 2, %s17
      // Predicated region
      $region45: #{tpu_custom_call.1} parent=5 // pred_check
        %p304 = pneg %p303
      $region46: #{tpu_custom_call.1} parent=5 // pred_check_branch
        %306 = sbr.rel (%p304) target = $region48
      $region47: #{tpu_custom_call.1} parent=5 // pred_region
        %s307 = ssub.s32 %s17, 2
        // Predicated region
        $region49: #{tpu_custom_call.1} parent=47 // pred_check
          %p308 = pneg %p127
        $region50: #{tpu_custom_call.1} parent=47 // pred_check_branch
          %310 = sbr.rel (%p308) target = $region52
        $region51: #{tpu_custom_call.1} parent=47 // pred_region
          %s311 = sand.u32 %s112, 1
          %s312 = scalar_lea.sflag [#allocation4], %s311
          %s313 = sand.u32 %s112, 1
          %s314 = smul.addr %s313, 8
          %s315 = scalar_lea.vmem [#allocation7], %s314
          %316 = dma.done %s312, 128
        $region52: #{tpu_custom_call.1} parent=47 // pred_fallthru
          _
      $region48: #{tpu_custom_call.1} parent=5 // pred_fallthru
        _
    $region6: #{tpu_custom_call.1} parent=1 // loop_footer
      %s21 = sadd.s32 1, %s17
    $region7: #{tpu_custom_call.1} parent=1 // loop_footer_branch
      %16 = sbr.rel target = $region3
    $region8: #{tpu_custom_call.1} parent=1 // loop_exit
      _
    %317 = vsyncpa [#allocation3], 1
    %s318 = scalar_lea.sflag [#allocation3], 1
    %319 = vsyncpa %s318, 1
    %320 = vsyncpa [#allocation6], 1
    %s321 = scalar_lea.sflag [#allocation6], 1
    %322 = vsyncpa %s321, 1
    %323 = vsyncpa [#allocation4], 1
    %s324 = scalar_lea.sflag [#allocation4], 1
    %325 = vsyncpa %s324, 1

</llo_original>
